<compile_context>
chip_gen: v7x
topology: tpu7x:2x2x1
jax: 0.10.0
libtpu: 0.0.40
codegen_flags: <defaults>
</compile_context>

<pallas_src>
import jax
import jax.numpy as jnp
from jax import lax
from jax.experimental import pallas as pl
from jax.experimental.pallas import tpu as pltpu

IN_FEATURES = 1000
OUT_FEATURES = 4
# Pad K so the lane axis is a multiple of 128; slot IN_FEATURES carries the bias.
K_PADDED = ((IN_FEATURES + 1 + 127) // 128) * 128  # -> 1024


def linear_kernel(x_ref, w_ref, o_ref):
    # x_ref: (B, Kp), w_ref: (N, Kp) native torch layout, o_ref: (B, N).
    # trans_b contraction (contract dim 1 of both), f32 accumulate.
    # Bias is already folded into column IN_FEATURES of x (1.0) and w (bias).
    o_ref[...] = lax.dot_general(
        x_ref[...],
        w_ref[...],
        dimension_numbers=(((1,), (1,)), ((), ())),
        preferred_element_type=jnp.float32,
    ).astype(o_ref.dtype)


def pack_params(weight, bias):
    """One-time (init-path) packing.

    weight: (4, 1000) f32  (native PyTorch nn.Linear layout)
    bias:   (4,)      f32
    returns (4, 1024) f32 with column 1000 = bias, columns 1001..1023 = 0.
    """
    n, k = weight.shape
    w_p = jnp.zeros((n, K_PADDED), weight.dtype)
    w_p = w_p.at[:, :k].set(weight)
    w_p = w_p.at[:, k].set(bias)
    return w_p


@jax.jit
def single_linear(x, w_packed):
    """y = x @ weight.T + bias  (PyTorch nn.Linear(1000, 4) semantics).

    x:        (B, 1000) f32
    w_packed: (4, 1024) f32 from pack_params()
    """
    b, k = x.shape
    n = w_packed.shape[0]

    # Single fused pad under jit: column k = 1.0 (bias multiplier), rest zeros.
    x_p = jnp.concatenate(
        [x, jnp.ones((b, 1), x.dtype), jnp.zeros((b, K_PADDED - k - 1), x.dtype)],
        axis=1,
    )

    vmem = pl.BlockSpec(memory_space=pltpu.MemorySpace.VMEM)
    cost = pl.CostEstimate(
        flops=2 * b * k * n,
        bytes_accessed=4 * (b * K_PADDED + n * K_PADDED + b * n),
        transcendentals=0,
    )

    return pl.pallas_call(
        linear_kernel,
        out_shape=jax.ShapeDtypeStruct((b, n), x.dtype),
        in_specs=[vmem, vmem],
        out_specs=vmem,
        cost_estimate=cost,
    )(x_p, w_packed)


if __name__ == "__main__":
    key = jax.random.PRNGKey(0)
    kx, kw, kb = jax.random.split(key, 3)

    batch = 8

    # Deterministic parameter init (mirrors nn.Linear(1000, 4) shapes).
    bound = 1.0 / (IN_FEATURES ** 0.5)
    weight = jax.random.uniform(
        kw, (OUT_FEATURES, IN_FEATURES), jnp.float32, -bound, bound
    )
    bias = jax.random.uniform(kb, (OUT_FEATURES,), jnp.float32, -bound, bound)

    x = jax.random.normal(kx, (batch, IN_FEATURES), jnp.float32)

    # One-time parameter packing (init path, not per-call).
    w_packed = jax.block_until_ready(pack_params(weight, bias))

    out = single_linear(x, w_packed)
    jax.block_until_ready(out)

    # Reference check against plain JAX.
    ref = x @ weight.T + bias
    assert out.shape == (batch, OUT_FEATURES)
    assert jnp.allclose(out, ref, atol=1e-4, rtol=1e-4)

    print("KERNEL_OK")
</pallas_src>

<mosaic_0001>
module attributes {stable_mosaic.version = 11 : i64} {
  func.func @linear_kernel(%arg0: memref<8x1024xf32, #tpu.memory_space<vmem>>, %arg1: memref<4x1024xf32, #tpu.memory_space<vmem>>, %arg2: memref<8x4xf32, #tpu.memory_space<vmem>>) attributes {dimension_semantics = [], scalar_prefetch = 0 : i64, scratch_operands = 0 : i64, tpu.core_type = #tpu.core_type<tc>} {
    %c0 = arith.constant 0 : index
    %c0_0 = arith.constant 0 : index
    %0 = vector.load %arg0[%c0, %c0_0] : memref<8x1024xf32, #tpu.memory_space<vmem>>, vector<8x1024xf32>
    %c0_1 = arith.constant 0 : index
    %c0_2 = arith.constant 0 : index
    %1 = vector.load %arg1[%c0_1, %c0_2] : memref<4x1024xf32, #tpu.memory_space<vmem>>, vector<4x1024xf32>
    %cst = arith.constant dense<0.000000e+00> : vector<8x4xf32>
    %2 = tpu.matmul %0, %1, %cst {dimension_numbers = #tpu.dot_dimension_numbers<[1], [1], [0], [0], [0, 0, 1, 0], [], []>} : vector<8x1024xf32>, vector<4x1024xf32>, vector<8x4xf32> -> vector<8x4xf32>
    %c0_3 = arith.constant 0 : index
    %c0_4 = arith.constant 0 : index
    %3 = vector.load %arg2[%c0_3, %c0_4] : memref<8x4xf32, #tpu.memory_space<vmem>>, vector<8x4xf32>
    tpu.vector_store %arg2[%c0_3, %c0_4], %2 {strides = array<i32>} : memref<8x4xf32, #tpu.memory_space<vmem>>, vector<8x4xf32>,
    return
  }
}

</mosaic_0001>

<llo_original>
// kernel: single_linear.1
$region0: #{single_linear.1}
  #allocation0 [shape = 'u32[]', space=smem, size = 0x4, offset = 0x4, fixed_abs, tag = 'smem constant byte address 0x4 - core index']
  #allocation1 [shape = 'u32[144,128]{1,0:T(1,128)}', space=vmem, size = 0x12000, scoped, tag = 'internal scratch']
  %s0 = inlined_call_operand.vmem [shape: f32[8,1024], index: 0, kind: input, shape index: {}]
  %s1 = inlined_call_operand.vmem [shape: f32[4,1024], index: 1, kind: input, shape index: {}]
  %s2 = inlined_call_operand.vmem [shape: f32[8,4], index: 2, kind: output, shape index: {}]
  %s3 = sld [smem:[#allocation0]]
  $region18: #{single_linear.1} parent=0
    _
  %s5 = ssub.s32 1, %s3
  %s6 = scalar_select 0, %s5, %s3
  // Predicated region
  $region2: #{single_linear.1} parent=0 // pred_check
    _
  $region3: #{single_linear.1} parent=0 // pred_check_branch
    %8 = sbr.rel (0) target = $region5
  $region4: #{single_linear.1} parent=0 // pred_region
    _
  $region5: #{single_linear.1} parent=0 // pred_fallthru
    _
  // Predicated region
  $region6: #{single_linear.1} parent=0 // pred_check
    _
  $region7: #{single_linear.1} parent=0 // pred_check_branch
    %10 = sbr.rel (0) target = $region9
  $region8: #{single_linear.1} parent=0 // pred_region
    _
  $region9: #{single_linear.1} parent=0 // pred_fallthru
    _
  %v11 = vld [vmem:[%s0] sm:$0xff]
  %v12 = vld [vmem:[%s0 + $0x8] sm:$0xff]
  %v13 = vld [vmem:[%s0 + $0x10] sm:$0xff]
  %v14 = vld [vmem:[%s0 + $0x18] sm:$0xff]
  %v15 = vld [vmem:[%s0 + $0x20] sm:$0xff]
  %v16 = vld [vmem:[%s0 + $0x28] sm:$0xff]
  %v17 = vld [vmem:[%s0 + $0x30] sm:$0xff]
  %v18 = vld [vmem:[%s0 + $0x38] sm:$0xff]
  %v19 = vld [vmem:[%s1] sm:$0xff]
  %v20 = vld [vmem:[%s1 + $0x8] sm:$0xff]
  %v21 = vld [vmem:[%s1 + $0x10] sm:$0xff]
  %v22 = vld [vmem:[%s1 + $0x18] sm:$0xff]
  %v27 = vcombine.high %v19, %v19
  %v28 = vcombine.high %v20, %v20
  %v29 = vcombine.high %v21, %v21
  %v30 = vcombine.high %v22, %v22
  %35 = vmatprep.subr.mxu0 %v27
  %36 = vmatpush1.xpose.msra.mxu0 %v19
  %37 = vmatprep.subr.mxu0 0.0
  %38 = vmatpush1.xpose.msra.mxu0 0.0
  %39 = vmatprep.subr.mxu0 0.0
  %40 = vmatpush1.xpose.msra.mxu0 0.0
  %41 = vmatprep.subr.mxu0 0.0
  %42 = vmatpush1.xpose.msra.mxu0 0.0
  %43 = vmatprep.subr.mxu0 0.0
  %44 = vmatpush1.xpose.msra.mxu0 0.0
  %45 = vmatprep.subr.mxu0 0.0
  %46 = vmatpush1.xpose.msra.mxu0 0.0
  %47 = vmatprep.subr.mxu0 0.0
  %48 = vmatpush1.xpose.msra.mxu0 0.0
  %49 = vmatprep.subr.mxu0 0.0
  %50 = vmatpush1.xpose.msra.mxu0 0.0
  %51 = vmatprep.subr.mxu0 0.0
  %52 = vmatpush1.xpose.msra.mxu0 0.0
  %53 = vmatprep.subr.mxu0 0.0
  %54 = vmatpush1.xpose.msra.mxu0 0.0
  %55 = vmatprep.subr.mxu0 0.0
  %56 = vmatpush1.xpose.msra.mxu0 0.0
  %57 = vmatprep.subr.mxu0 0.0
  %58 = vmatpush1.xpose.msra.mxu0 0.0
  %59 = vmatprep.subr.mxu0 0.0
  %60 = vmatpush1.xpose.msra.mxu0 0.0
  %61 = vmatprep.subr.mxu0 0.0
  %62 = vmatpush1.xpose.msra.mxu0 0.0
  %63 = vmatprep.subr.mxu0 0.0
  %64 = vmatpush1.xpose.msra.mxu0 0.0
  %65 = vmatprep.subr.mxu0 0.0
  %66 = vmatpush1.xpose.msra.mxu0 0.0
  %67 = vmatprep.subr.mxu0 0.0
  %68 = vmatpush1.xpose.msra.mxu0 0.0
  %69 = vmatprep.subr.mxu0 0.0
  %70 = vmatpush1.xpose.msra.mxu0 0.0
  %71 = vmatprep.subr.mxu0 0.0
  %72 = vmatpush1.xpose.msra.mxu0 0.0
  %73 = vmatprep.subr.mxu0 0.0
  %74 = vmatpush1.xpose.msra.mxu0 0.0
  %75 = vmatprep.subr.mxu0 0.0
  %76 = vmatpush1.xpose.msra.mxu0 0.0
  %77 = vmatprep.subr.mxu0 0.0
  %78 = vmatpush1.xpose.msra.mxu0 0.0
  %79 = vmatprep.subr.mxu0 0.0
  %80 = vmatpush1.xpose.msra.mxu0 0.0
  %81 = vmatprep.subr.mxu0 0.0
  %82 = vmatpush1.xpose.msra.mxu0 0.0
  %83 = vmatprep.subr.mxu0 0.0
  %84 = vmatpush1.xpose.msra.mxu0 0.0
  %85 = vmatprep.subr.mxu0 0.0
  %86 = vmatpush1.xpose.msra.mxu0 0.0
  %87 = vmatprep.subr.mxu0 0.0
  %88 = vmatpush1.xpose.msra.mxu0 0.0
  %89 = vmatprep.subr.mxu0 0.0
  %90 = vmatpush1.xpose.msra.mxu0 0.0
  %91 = vmatprep.subr.mxu0 0.0
  %92 = vmatpush1.xpose.msra.mxu0 0.0
  %93 = vmatprep.subr.mxu0 0.0
  %94 = vmatpush1.xpose.msra.mxu0 0.0
  %95 = vmatprep.subr.mxu0 0.0
  %96 = vmatpush1.xpose.msra.mxu0 0.0
  %97 = vmatprep.subr.mxu0 0.0
  %98 = vmatpush1.xpose.msra.mxu0 0.0
  %99 = vmatprep.mubr.f32.mxu0 %v12
  %100 = vmatmul.mubr.f32.gmra.mrb[0].mxu0 %v11
  %v101 = vpop.f32.mrb[0].mxu0
  %v102 = vadd.f32 0.0, %v101
  %v103 = vpop.f32.mrb[0].mxu0
  %104 = vdwg.mxu0
  %105 = vmatprep.subr.mxu0 %v28
  %106 = vmatpush1.xpose.msra.mxu0 %v20
  %107 = vmatprep.subr.mxu0 0.0
  %108 = vmatpush1.xpose.msra.mxu0 0.0
  %109 = vmatprep.subr.mxu0 0.0
  %110 = vmatpush1.xpose.msra.mxu0 0.0
  %111 = vmatprep.subr.mxu0 0.0
  %112 = vmatpush1.xpose.msra.mxu0 0.0
  %113 = vmatprep.subr.mxu0 0.0
  %114 = vmatpush1.xpose.msra.mxu0 0.0
  %115 = vmatprep.subr.mxu0 0.0
  %116 = vmatpush1.xpose.msra.mxu0 0.0
  %117 = vmatprep.subr.mxu0 0.0
  %118 = vmatpush1.xpose.msra.mxu0 0.0
  %119 = vmatprep.subr.mxu0 0.0
  %120 = vmatpush1.xpose.msra.mxu0 0.0
  %121 = vmatprep.subr.mxu0 0.0
  %122 = vmatpush1.xpose.msra.mxu0 0.0
  %123 = vmatprep.subr.mxu0 0.0
  %124 = vmatpush1.xpose.msra.mxu0 0.0
  %125 = vmatprep.subr.mxu0 0.0
  %126 = vmatpush1.xpose.msra.mxu0 0.0
  %127 = vmatprep.subr.mxu0 0.0
  %128 = vmatpush1.xpose.msra.mxu0 0.0
  %129 = vmatprep.subr.mxu0 0.0
  %130 = vmatpush1.xpose.msra.mxu0 0.0
  %131 = vmatprep.subr.mxu0 0.0
  %132 = vmatpush1.xpose.msra.mxu0 0.0
  %133 = vmatprep.subr.mxu0 0.0
  %134 = vmatpush1.xpose.msra.mxu0 0.0
  %135 = vmatprep.subr.mxu0 0.0
  %136 = vmatpush1.xpose.msra.mxu0 0.0
  %137 = vmatprep.subr.mxu0 0.0
  %138 = vmatpush1.xpose.msra.mxu0 0.0
  %139 = vmatprep.subr.mxu0 0.0
  %140 = vmatpush1.xpose.msra.mxu0 0.0
  %141 = vmatprep.subr.mxu0 0.0
  %142 = vmatpush1.xpose.msra.mxu0 0.0
  %143 = vmatprep.subr.mxu0 0.0
  %144 = vmatpush1.xpose.msra.mxu0 0.0
  %145 = vmatprep.subr.mxu0 0.0
  %146 = vmatpush1.xpose.msra.mxu0 0.0
  %147 = vmatprep.subr.mxu0 0.0
  %148 = vmatpush1.xpose.msra.mxu0 0.0
  %149 = vmatprep.subr.mxu0 0.0
  %150 = vmatpush1.xpose.msra.mxu0 0.0
  %151 = vmatprep.subr.mxu0 0.0
  %152 = vmatpush1.xpose.msra.mxu0 0.0
  %153 = vmatprep.subr.mxu0 0.0
  %154 = vmatpush1.xpose.msra.mxu0 0.0
  %155 = vmatprep.subr.mxu0 0.0
  %156 = vmatpush1.xpose.msra.mxu0 0.0
  %157 = vmatprep.subr.mxu0 0.0
  %158 = vmatpush1.xpose.msra.mxu0 0.0
  %159 = vmatprep.subr.mxu0 0.0
  %160 = vmatpush1.xpose.msra.mxu0 0.0
  %161 = vmatprep.subr.mxu0 0.0
  %162 = vmatpush1.xpose.msra.mxu0 0.0
  %163 = vmatprep.subr.mxu0 0.0
  %164 = vmatpush1.xpose.msra.mxu0 0.0
  %165 = vmatprep.subr.mxu0 0.0
  %166 = vmatpush1.xpose.msra.mxu0 0.0
  %167 = vmatprep.subr.mxu0 0.0
  %168 = vmatpush1.xpose.msra.mxu0 0.0
  %169 = vmatprep.mubr.f32.mxu0 %v14
  %170 = vmatmul.mubr.f32.gmra.mrb[0].mxu0 %v13
  %v171 = vpop.f32.mrb[0].mxu0
  %v172 = vadd.f32 %v102, %v171
  %v173 = vpop.f32.mrb[0].mxu0
  %174 = vdwg.mxu0
  %175 = vmatprep.subr.mxu0 %v29
  %176 = vmatpush1.xpose.msra.mxu0 %v21
  %177 = vmatprep.subr.mxu0 0.0
  %178 = vmatpush1.xpose.msra.mxu0 0.0
  %179 = vmatprep.subr.mxu0 0.0
  %180 = vmatpush1.xpose.msra.mxu0 0.0
  %181 = vmatprep.subr.mxu0 0.0
  %182 = vmatpush1.xpose.msra.mxu0 0.0
  %183 = vmatprep.subr.mxu0 0.0
  %184 = vmatpush1.xpose.msra.mxu0 0.0
  %185 = vmatprep.subr.mxu0 0.0
  %186 = vmatpush1.xpose.msra.mxu0 0.0
  %187 = vmatprep.subr.mxu0 0.0
  %188 = vmatpush1.xpose.msra.mxu0 0.0
  %189 = vmatprep.subr.mxu0 0.0
  %190 = vmatpush1.xpose.msra.mxu0 0.0
  %191 = vmatprep.subr.mxu0 0.0
  %192 = vmatpush1.xpose.msra.mxu0 0.0
  %193 = vmatprep.subr.mxu0 0.0
  %194 = vmatpush1.xpose.msra.mxu0 0.0
  %195 = vmatprep.subr.mxu0 0.0
  %196 = vmatpush1.xpose.msra.mxu0 0.0
  %197 = vmatprep.subr.mxu0 0.0
  %198 = vmatpush1.xpose.msra.mxu0 0.0
  %199 = vmatprep.subr.mxu0 0.0
  %200 = vmatpush1.xpose.msra.mxu0 0.0
  %201 = vmatprep.subr.mxu0 0.0
  %202 = vmatpush1.xpose.msra.mxu0 0.0
  %203 = vmatprep.subr.mxu0 0.0
  %204 = vmatpush1.xpose.msra.mxu0 0.0
  %205 = vmatprep.subr.mxu0 0.0
  %206 = vmatpush1.xpose.msra.mxu0 0.0
  %207 = vmatprep.subr.mxu0 0.0
  %208 = vmatpush1.xpose.msra.mxu0 0.0
  %209 = vmatprep.subr.mxu0 0.0
  %210 = vmatpush1.xpose.msra.mxu0 0.0
  %211 = vmatprep.subr.mxu0 0.0
  %212 = vmatpush1.xpose.msra.mxu0 0.0
  %213 = vmatprep.subr.mxu0 0.0
  %214 = vmatpush1.xpose.msra.mxu0 0.0
  %215 = vmatprep.subr.mxu0 0.0
  %216 = vmatpush1.xpose.msra.mxu0 0.0
  %217 = vmatprep.subr.mxu0 0.0
  %218 = vmatpush1.xpose.msra.mxu0 0.0
  %219 = vmatprep.subr.mxu0 0.0
  %220 = vmatpush1.xpose.msra.mxu0 0.0
  %221 = vmatprep.subr.mxu0 0.0
  %222 = vmatpush1.xpose.msra.mxu0 0.0
  %223 = vmatprep.subr.mxu0 0.0
  %224 = vmatpush1.xpose.msra.mxu0 0.0
  %225 = vmatprep.subr.mxu0 0.0
  %226 = vmatpush1.xpose.msra.mxu0 0.0
  %227 = vmatprep.subr.mxu0 0.0
  %228 = vmatpush1.xpose.msra.mxu0 0.0
  %229 = vmatprep.subr.mxu0 0.0
  %230 = vmatpush1.xpose.msra.mxu0 0.0
  %231 = vmatprep.subr.mxu0 0.0
  %232 = vmatpush1.xpose.msra.mxu0 0.0
  %233 = vmatprep.subr.mxu0 0.0
  %234 = vmatpush1.xpose.msra.mxu0 0.0
  %235 = vmatprep.subr.mxu0 0.0
  %236 = vmatpush1.xpose.msra.mxu0 0.0
  %237 = vmatprep.subr.mxu0 0.0
  %238 = vmatpush1.xpose.msra.mxu0 0.0
  %239 = vmatprep.mubr.f32.mxu0 %v16
  %240 = vmatmul.mubr.f32.gmra.mrb[0].mxu0 %v15
  %v241 = vpop.f32.mrb[0].mxu0
  %v242 = vadd.f32 %v172, %v241
  %v243 = vpop.f32.mrb[0].mxu0
  %244 = vdwg.mxu0
  %245 = vmatprep.subr.mxu0 %v30
  %246 = vmatpush1.xpose.msra.mxu0 %v22
  %247 = vmatprep.subr.mxu0 0.0
  %248 = vmatpush1.xpose.msra.mxu0 0.0
  %249 = vmatprep.subr.mxu0 0.0
  %250 = vmatpush1.xpose.msra.mxu0 0.0
  %251 = vmatprep.subr.mxu0 0.0
  %252 = vmatpush1.xpose.msra.mxu0 0.0
  %253 = vmatprep.subr.mxu0 0.0
  %254 = vmatpush1.xpose.msra.mxu0 0.0
  %255 = vmatprep.subr.mxu0 0.0
  %256 = vmatpush1.xpose.msra.mxu0 0.0
  %257 = vmatprep.subr.mxu0 0.0
  %258 = vmatpush1.xpose.msra.mxu0 0.0
  %259 = vmatprep.subr.mxu0 0.0
  %260 = vmatpush1.xpose.msra.mxu0 0.0
  %261 = vmatprep.subr.mxu0 0.0
  %262 = vmatpush1.xpose.msra.mxu0 0.0
  %263 = vmatprep.subr.mxu0 0.0
  %264 = vmatpush1.xpose.msra.mxu0 0.0
  %265 = vmatprep.subr.mxu0 0.0
  %266 = vmatpush1.xpose.msra.mxu0 0.0
  %267 = vmatprep.subr.mxu0 0.0
  %268 = vmatpush1.xpose.msra.mxu0 0.0
  %269 = vmatprep.subr.mxu0 0.0
  %270 = vmatpush1.xpose.msra.mxu0 0.0
  %271 = vmatprep.subr.mxu0 0.0
  %272 = vmatpush1.xpose.msra.mxu0 0.0
  %273 = vmatprep.subr.mxu0 0.0
  %274 = vmatpush1.xpose.msra.mxu0 0.0
  %275 = vmatprep.subr.mxu0 0.0
  %276 = vmatpush1.xpose.msra.mxu0 0.0
  %277 = vmatprep.subr.mxu0 0.0
  %278 = vmatpush1.xpose.msra.mxu0 0.0
  %279 = vmatprep.subr.mxu0 0.0
  %280 = vmatpush1.xpose.msra.mxu0 0.0
  %281 = vmatprep.subr.mxu0 0.0
  %282 = vmatpush1.xpose.msra.mxu0 0.0
  %283 = vmatprep.subr.mxu0 0.0
  %284 = vmatpush1.xpose.msra.mxu0 0.0
  %285 = vmatprep.subr.mxu0 0.0
  %286 = vmatpush1.xpose.msra.mxu0 0.0
  %287 = vmatprep.subr.mxu0 0.0
  %288 = vmatpush1.xpose.msra.mxu0 0.0
  %289 = vmatprep.subr.mxu0 0.0
  %290 = vmatpush1.xpose.msra.mxu0 0.0
  %291 = vmatprep.subr.mxu0 0.0
  %292 = vmatpush1.xpose.msra.mxu0 0.0
  %293 = vmatprep.subr.mxu0 0.0
  %294 = vmatpush1.xpose.msra.mxu0 0.0
  %295 = vmatprep.subr.mxu0 0.0
  %296 = vmatpush1.xpose.msra.mxu0 0.0
  %297 = vmatprep.subr.mxu0 0.0
  %298 = vmatpush1.xpose.msra.mxu0 0.0
  %299 = vmatprep.subr.mxu0 0.0
  %300 = vmatpush1.xpose.msra.mxu0 0.0
  %301 = vmatprep.subr.mxu0 0.0
  %302 = vmatpush1.xpose.msra.mxu0 0.0
  %303 = vmatprep.subr.mxu0 0.0
  %304 = vmatpush1.xpose.msra.mxu0 0.0
  %305 = vmatprep.subr.mxu0 0.0
  %306 = vmatpush1.xpose.msra.mxu0 0.0
  %307 = vmatprep.subr.mxu0 0.0
  %308 = vmatpush1.xpose.msra.mxu0 0.0
  %309 = vmatprep.mubr.f32.mxu0 %v18
  %310 = vmatmul.mubr.f32.gmra.mrb[0].mxu0 %v17
  %v311 = vpop.f32.mrb[0].mxu0
  %v312 = vadd.f32 %v242, %v311
  %v313 = vpop.f32.mrb[0].mxu0
  %314 = vdwg.mxu0
  %vm315 = vcmask 31744
  %316 = vst.msk [vmem:[%s2] sm:$0xff] %vm315, %v312
  // Predicated region
  $region10: #{single_linear.1} parent=0 // pred_check
    _
  $region11: #{single_linear.1} parent=0 // pred_check_branch
    %318 = sbr.rel (0) target = $region13
  $region12: #{single_linear.1} parent=0 // pred_region
    _
  $region13: #{single_linear.1} parent=0 // pred_fallthru
    _
  // Predicated region
  $region14: #{single_linear.1} parent=0 // pred_check
    _
  $region15: #{single_linear.1} parent=0 // pred_check_branch
    %320 = sbr.rel (0) target = $region17
  $region16: #{single_linear.1} parent=0 // pred_region
    _
  $region17: #{single_linear.1} parent=0 // pred_fallthru
    _

</llo_original>
